<compile_context>
chip_gen: v5e
topology: v5e:2x2
jax: 0.10.0
libtpu: 0.0.40
codegen_flags: <defaults>
</compile_context>

<pallas_src>
import functools

import jax
import jax.numpy as jnp
from jax import lax
from jax.experimental import pallas as pl
from jax.experimental.pallas import tpu as pltpu

DATA_SIZE = 50
BATCH_SIZE = 10
HIDDEN_SIZE = 20
OUTPUT_SIZE = 10
SEQ_LEN = 8

_LANE = 128      # lane width (last dim)
_SUBLANE = 8     # sublane width (second-to-last dim)

_VMEM_SPEC = pl.BlockSpec(memory_space=pltpu.MemorySpace.VMEM)


def _round_up(x, m):
    return ((x + m - 1) // m) * m


# ---------------------------------------------------------------------------
# Shared cell math (traced inside the kernels).  All shapes are padded:
#   x (B_pad, D_pad), h (B_pad, H_pad) f32; weights possibly bf16;
#   b_ih_b (B_pad, H_pad), b_ho_b (B_pad, O_pad) f32 (padded O lanes = -1e30).
# ---------------------------------------------------------------------------
def _cell_compute(x, h, w_ih_d, w_ih_h, b_ih_b, w_ho, b_ho_b):
    dt = w_ih_d.dtype  # MXU operand dtype (f32 or bf16); accumulation is f32.
    # cat(x, h) @ W_i2h + b  ==  x @ W_i2h[:D] + h @ W_i2h[D:] + b
    pre_h = (
        jnp.dot(x.astype(dt), w_ih_d, preferred_element_type=jnp.float32)
        + jnp.dot(h.astype(dt), w_ih_h, preferred_element_type=jnp.float32)
        + b_ih_b
    )
    hidden = jnp.maximum(pre_h, 0.0)  # relu, f32

    logits = jnp.dot(hidden.astype(dt), w_ho,
                     preferred_element_type=jnp.float32) + b_ho_b

    # numerically-stable softmax over the (padded) output axis.
    # Padded lanes carry a -1e30 bias -> exp underflows to exactly 0.
    m = jnp.max(logits, axis=-1, keepdims=True)
    e = jnp.exp(logits - m)
    denom = jnp.sum(e, axis=-1, keepdims=True)
    probs = e * pl.reciprocal(denom, approx=True)   # EUP vrcp (approx, ~1e-3)
    return hidden, probs


# ---------------------------------------------------------------------------
# Single-step kernel (exactly the module's forward(data, last_hidden)).
# ---------------------------------------------------------------------------
def rnn_cell_kernel(data_ref, h_ref, w_ih_d_ref, w_ih_h_ref, b_ih_ref,
                    w_ho_ref, b_ho_ref, hidden_out_ref, out_ref):
    B = data_ref.shape[0]
    b_ih_b = jnp.broadcast_to(b_ih_ref[...], (B, b_ih_ref.shape[1]))
    b_ho_b = jnp.broadcast_to(b_ho_ref[...], (B, b_ho_ref.shape[1]))
    hidden, probs = _cell_compute(
        data_ref[...], h_ref[...],
        w_ih_d_ref[...], w_ih_h_ref[...], b_ih_b, w_ho_ref[...], b_ho_b,
    )
    hidden_out_ref[...] = hidden.astype(hidden_out_ref.dtype)
    out_ref[...] = probs.astype(out_ref.dtype)


# ---------------------------------------------------------------------------
# Fused-sequence kernel: the ENTIRE recurrence in one invocation (no grid).
#   - (T,B,D) input and both output slabs VMEM-resident, one DMA each way
#   - weights loaded once, bias broadcasts hoisted out of the unrolled loop
#   - hidden carry threaded through lax.fori_loop(unroll=True)
# ---------------------------------------------------------------------------
def rnn_seq_kernel(data_ref, h0_ref, w_ih_d_ref, w_ih_h_ref, b_ih_ref,
                   w_ho_ref, b_ho_ref, hidden_seq_ref, out_seq_ref):
    T, B, _ = data_ref.shape
    H_pad = w_ih_h_ref.shape[1]
    O_pad = w_ho_ref.shape[1]

    # Hoisted: one load per weight, one broadcast per bias for all T steps.
    w_ih_d = w_ih_d_ref[...]
    w_ih_h = w_ih_h_ref[...]
    w_ho = w_ho_ref[...]
    b_ih_b = jnp.broadcast_to(b_ih_ref[...], (B, H_pad))
    b_ho_b = jnp.broadcast_to(b_ho_ref[...], (B, O_pad))

    def step(t, h):
        hidden, probs = _cell_compute(
            data_ref[t], h, w_ih_d, w_ih_h, b_ih_b, w_ho, b_ho_b)
        hidden_seq_ref[t] = hidden.astype(hidden_seq_ref.dtype)
        out_seq_ref[t] = probs.astype(out_seq_ref.dtype)
        return hidden  # recurrent carry stays in f32 vregs, never hits HBM

    lax.fori_loop(0, T, step, h0_ref[...].astype(jnp.float32), unroll=True)


# ---------------------------------------------------------------------------
# Wrappers (pad to (8,128)-friendly shapes, call the kernel, slice back).
# ---------------------------------------------------------------------------
def _pad2(x, rows, cols):
    r, c = x.shape
    return jnp.pad(x, ((0, rows - r), (0, cols - c)))


@functools.partial(jax.jit, static_argnames=("out_size",))
def rnn_forward(data, last_hidden, prepared, out_size=OUTPUT_SIZE):
    """One RNN step. data: (B, D), last_hidden: (B, H) -> (hidden (B,H), output (B,O))."""
    w_ih_d, w_ih_h, b_ih, w_ho, b_ho = prepared
    B, _ = data.shape
    H = last_hidden.shape[1]
    D_pad, H_pad = w_ih_d.shape
    O_pad = w_ho.shape[1]
    B_pad = _round_up(max(B, _SUBLANE), _SUBLANE)

    data_p = _pad2(data.astype(jnp.float32), B_pad, D_pad)
    h_p = _pad2(last_hidden.astype(jnp.float32), B_pad, H_pad)

    hidden_p, out_p = pl.pallas_call(
        rnn_cell_kernel,
        out_shape=(
            jax.ShapeDtypeStruct((B_pad, H_pad), jnp.float32),
            jax.ShapeDtypeStruct((B_pad, O_pad), jnp.float32),
        ),
        in_specs=[_VMEM_SPEC] * 7,
        out_specs=(_VMEM_SPEC, _VMEM_SPEC),
    )(data_p, h_p, w_ih_d, w_ih_h, b_ih, w_ho, b_ho)
    return hidden_p[:B, :H], out_p[:B, :out_size]


@functools.partial(jax.jit, static_argnames=("out_size",))
def rnn_forward_sequence(data_seq, h0, prepared, out_size=OUTPUT_SIZE):
    """Apply the RNN cell over a sequence in ONE kernel invocation.

    data_seq: (T, B, D), h0: (B, H) -> (hidden_seq (T,B,H), out_seq (T,B,O)).
    Step t uses hidden from step t-1, identical to calling the module T times.
    """
    w_ih_d, w_ih_h, b_ih, w_ho, b_ho = prepared
    T, B, D = data_seq.shape
    H = h0.shape[1]
    D_pad, H_pad = w_ih_d.shape
    O_pad = w_ho.shape[1]
    B_pad = _round_up(max(B, _SUBLANE), _SUBLANE)

    data_p = jnp.pad(data_seq.astype(jnp.float32),
                     ((0, 0), (0, B_pad - B), (0, D_pad - D)))
    h0_p = _pad2(h0.astype(jnp.float32), B_pad, H_pad)

    hidden_p, out_p = pl.pallas_call(
        rnn_seq_kernel,
        out_shape=(
            jax.ShapeDtypeStruct((T, B_pad, H_pad), jnp.float32),
            jax.ShapeDtypeStruct((T, B_pad, O_pad), jnp.float32),
        ),
        in_specs=[_VMEM_SPEC] * 7,
        out_specs=(_VMEM_SPEC, _VMEM_SPEC),
    )(data_p, h0_p, w_ih_d, w_ih_h, b_ih, w_ho, b_ho)
    return hidden_p[:, :B, :H], out_p[:, :B, :out_size]


# ---------------------------------------------------------------------------
# Parameters.
# ---------------------------------------------------------------------------
def init_params(key, data_size, hidden_size, output_size):
    """Module-equivalent parameters, stored as (in_features, out_features)."""
    input_size = data_size + hidden_size
    k1, k2, k3, k4 = jax.random.split(key, 4)
    bound_i2h = 1.0 / jnp.sqrt(input_size)
    bound_h2o = 1.0 / jnp.sqrt(hidden_size)
    w_i2h = jax.random.uniform(k1, (input_size, hidden_size), jnp.float32,
                               -bound_i2h, bound_i2h)
    b_i2h = jax.random.uniform(k2, (hidden_size,), jnp.float32,
                               -bound_i2h, bound_i2h)
    w_h2o = jax.random.uniform(k3, (hidden_size, output_size), jnp.float32,
                               -bound_h2o, bound_h2o)
    b_h2o = jax.random.uniform(k4, (output_size,), jnp.float32,
                               -bound_h2o, bound_h2o)
    return w_i2h, b_i2h, w_h2o, b_h2o


def prepare_params(params, data_size, mxu_dtype=jnp.bfloat16):
    """One-time weight prep (hoisted out of the hot path).

      * split W_i2h at row D (folds the cat into a split matmul),
      * zero-pad all feature dims to 128 lanes (lane-dense, unmasked vst),
      * padded output-logit lanes get a -1e30 bias so softmax ignores them,
      * optionally pre-cast MXU operands to bf16 (f32 accumulation in-kernel).
    """
    w_i2h, b_i2h, w_h2o, b_h2o = params
    D = data_size
    H = w_i2h.shape[1]
    O = w_h2o.shape[1]
    D_pad = _round_up(D, _LANE)
    H_pad = _round_up(H, _LANE)
    O_pad = _round_up(O, _LANE)

    w_ih_d = jnp.zeros((D_pad, H_pad), mxu_dtype).at[:D, :H].set(
        w_i2h[:D, :].astype(mxu_dtype))
    w_ih_h = jnp.zeros((H_pad, H_pad), mxu_dtype).at[:H, :H].set(
        w_i2h[D:, :].astype(mxu_dtype))
    w_ho = jnp.zeros((H_pad, O_pad), mxu_dtype).at[:H, :O].set(
        w_h2o.astype(mxu_dtype))
    b_ih = jnp.zeros((1, H_pad), jnp.float32).at[:, :H].set(
        b_i2h.astype(jnp.float32))
    b_ho = jnp.full((1, O_pad), -1e30, jnp.float32).at[:, :O].set(
        b_h2o.astype(jnp.float32))
    return (w_ih_d, w_ih_h, b_ih, w_ho, b_ho)


# ---------------------------------------------------------------------------
# Pure-JAX references.
# ---------------------------------------------------------------------------
def rnn_forward_ref(data, last_hidden, params):
    w_i2h, b_i2h, w_h2o, b_h2o = params
    x = jnp.concatenate([data, last_hidden], axis=1)
    hidden = jax.nn.relu(x @ w_i2h + b_i2h)
    output = jax.nn.softmax(hidden @ w_h2o + b_h2o, axis=1)
    return hidden, output


def rnn_forward_sequence_ref(data_seq, h0, params):
    def step(h, x):
        h_new, out = rnn_forward_ref(x, h, params)
        return h_new, (h_new, out)

    _, (hidden_seq, out_seq) = jax.lax.scan(step, h0, data_seq)
    return hidden_seq, out_seq


# ---------------------------------------------------------------------------
# Demo / correctness check.
# ---------------------------------------------------------------------------
if __name__ == "__main__":
    key = jax.random.PRNGKey(0)
    k_param, k_data, k_hidden, k_seq = jax.random.split(key, 4)

    params = init_params(k_param, DATA_SIZE, HIDDEN_SIZE, OUTPUT_SIZE)
    prepared_f32 = prepare_params(params, DATA_SIZE, mxu_dtype=jnp.float32)
    prepared_bf16 = prepare_params(params, DATA_SIZE, mxu_dtype=jnp.bfloat16)

    data = jax.random.normal(k_data, (BATCH_SIZE, DATA_SIZE), jnp.float32)
    last_hidden = jax.random.normal(k_hidden, (BATCH_SIZE, HIDDEN_SIZE), jnp.float32)
    data_seq = jax.random.normal(k_seq, (SEQ_LEN, BATCH_SIZE, DATA_SIZE), jnp.float32)

    # --- single step, f32 MXU operands (exact module.forward semantics) ---
    hidden, output = rnn_forward(data, last_hidden, prepared_f32)
    jax.block_until_ready((hidden, output))
    hidden_ref, output_ref = rnn_forward_ref(data, last_hidden, params)

    assert hidden.shape == (BATCH_SIZE, HIDDEN_SIZE)
    assert output.shape == (BATCH_SIZE, OUTPUT_SIZE)
    assert jnp.allclose(hidden, hidden_ref, atol=1e-4, rtol=1e-4)
    # approx reciprocal in the softmax -> ~1e-3 relative slack on the probs.
    assert jnp.allclose(output, output_ref, atol=2e-3, rtol=2e-3)

    # --- fused sequence, f32 MXU operands (tight check) ---
    hidden_seq, out_seq = rnn_forward_sequence(data_seq, last_hidden, prepared_f32)
    jax.block_until_ready((hidden_seq, out_seq))
    hidden_seq_ref, out_seq_ref = rnn_forward_sequence_ref(data_seq, last_hidden, params)

    assert hidden_seq.shape == (SEQ_LEN, BATCH_SIZE, HIDDEN_SIZE)
    assert out_seq.shape == (SEQ_LEN, BATCH_SIZE, OUTPUT_SIZE)
    assert jnp.allclose(hidden_seq, hidden_seq_ref, atol=1e-4, rtol=1e-4)
    assert jnp.allclose(out_seq, out_seq_ref, atol=2e-3, rtol=2e-3)

    # --- fused sequence, bf16 MXU operands / f32 accumulation (perf path) ---
    hidden_seq_b, out_seq_b = rnn_forward_sequence(data_seq, last_hidden, prepared_bf16)
    jax.block_until_ready((hidden_seq_b, out_seq_b))
    # bf16 operands round at ~2^-9 relative; looser tolerance, same semantics.
    assert jnp.allclose(hidden_seq_b, hidden_seq_ref, atol=5e-2, rtol=5e-2)
    assert jnp.allclose(out_seq_b, out_seq_ref, atol=2e-2, rtol=2e-2)

    print("KERNEL_OK")
</pallas_src>

<mosaic_0001>
module attributes {stable_mosaic.version = 11 : i64} {
  func.func @rnn_cell_kernel(%arg0: memref<16x128xf32, #tpu.memory_space<vmem>>, %arg1: memref<16x128xf32, #tpu.memory_space<vmem>>, %arg2: memref<128x128xf32, #tpu.memory_space<vmem>>, %arg3: memref<128x128xf32, #tpu.memory_space<vmem>>, %arg4: memref<1x128xf32, #tpu.memory_space<vmem>>, %arg5: memref<128x128xf32, #tpu.memory_space<vmem>>, %arg6: memref<1x128xf32, #tpu.memory_space<vmem>>, %arg7: memref<16x128xf32, #tpu.memory_space<vmem>>, %arg8: memref<16x128xf32, #tpu.memory_space<vmem>>) attributes {dimension_semantics = [], scalar_prefetch = 0 : i64, scratch_operands = 0 : i64, tpu.core_type = #tpu.core_type<tc>} {
    %c0 = arith.constant 0 : index
    %c0_0 = arith.constant 0 : index
    %0 = vector.load %arg4[%c0, %c0_0] : memref<1x128xf32, #tpu.memory_space<vmem>>, vector<1x128xf32>
    %1 = vector.shape_cast %0 : vector<1x128xf32> to vector<1x128xf32>
    %2 = vector.broadcast %1 : vector<1x128xf32> to vector<16x128xf32>
    %c0_1 = arith.constant 0 : index
    %c0_2 = arith.constant 0 : index
    %3 = vector.load %arg6[%c0_1, %c0_2] : memref<1x128xf32, #tpu.memory_space<vmem>>, vector<1x128xf32>
    %4 = vector.shape_cast %3 : vector<1x128xf32> to vector<1x128xf32>
    %5 = vector.broadcast %4 : vector<1x128xf32> to vector<16x128xf32>
    %c0_3 = arith.constant 0 : index
    %c0_4 = arith.constant 0 : index
    %6 = vector.load %arg0[%c0_3, %c0_4] : memref<16x128xf32, #tpu.memory_space<vmem>>, vector<16x128xf32>
    %c0_5 = arith.constant 0 : index
    %c0_6 = arith.constant 0 : index
    %7 = vector.load %arg1[%c0_5, %c0_6] : memref<16x128xf32, #tpu.memory_space<vmem>>, vector<16x128xf32>
    %c0_7 = arith.constant 0 : index
    %c0_8 = arith.constant 0 : index
    %8 = vector.load %arg2[%c0_7, %c0_8] : memref<128x128xf32, #tpu.memory_space<vmem>>, vector<128x128xf32>
    %c0_9 = arith.constant 0 : index
    %c0_10 = arith.constant 0 : index
    %9 = vector.load %arg3[%c0_9, %c0_10] : memref<128x128xf32, #tpu.memory_space<vmem>>, vector<128x128xf32>
    %c0_11 = arith.constant 0 : index
    %c0_12 = arith.constant 0 : index
    %10 = vector.load %arg5[%c0_11, %c0_12] : memref<128x128xf32, #tpu.memory_space<vmem>>, vector<128x128xf32>
    %cst = arith.constant dense<0.000000e+00> : vector<16x128xf32>
    %11 = tpu.matmul %6, %8, %cst {dimension_numbers = #tpu.dot_dimension_numbers<[1], [0], [0], [1], [0, 0, 1, 1], [], []>} : vector<16x128xf32>, vector<128x128xf32>, vector<16x128xf32> -> vector<16x128xf32>
    %cst_13 = arith.constant dense<0.000000e+00> : vector<16x128xf32>
    %12 = tpu.matmul %7, %9, %cst_13 {dimension_numbers = #tpu.dot_dimension_numbers<[1], [0], [0], [1], [0, 0, 1, 1], [], []>} : vector<16x128xf32>, vector<128x128xf32>, vector<16x128xf32> -> vector<16x128xf32>
    %13 = arith.addf %11, %12 : vector<16x128xf32>
    %14 = arith.addf %13, %2 : vector<16x128xf32>
    %cst_14 = arith.constant 0.000000e+00 : f32
    %15 = vector.broadcast %cst_14 : f32 to vector<16x128xf32>
    %16 = arith.maximumf %14, %15 : vector<16x128xf32>
    %cst_15 = arith.constant dense<0.000000e+00> : vector<16x128xf32>
    %17 = tpu.matmul %16, %10, %cst_15 {dimension_numbers = #tpu.dot_dimension_numbers<[1], [0], [0], [1], [0, 0, 1, 1], [], []>} : vector<16x128xf32>, vector<128x128xf32>, vector<16x128xf32> -> vector<16x128xf32>
    %18 = arith.addf %17, %5 : vector<16x128xf32>
    %cst_16 = arith.constant dense<0xFF800000> : vector<16xf32>
    %19 = vector.multi_reduction <maximumf>, %18, %cst_16 [1] : vector<16x128xf32> to vector<16xf32>
    %20 = vector.shape_cast %19 : vector<16xf32> to vector<16x1xf32>
    %21 = vector.broadcast %20 : vector<16x1xf32> to vector<16x128xf32>
    %22 = arith.subf %18, %21 : vector<16x128xf32>
    %23 = math.exp %22 : vector<16x128xf32>
    %cst_17 = arith.constant dense<0.000000e+00> : vector<16xf32>
    %24 = vector.multi_reduction <add>, %23, %cst_17 [1] : vector<16x128xf32> to vector<16xf32>
    %25 = vector.shape_cast %24 : vector<16xf32> to vector<16x1xf32>
    %26 = tpu.reciprocal %25 {approx = true} : vector<16x1xf32> -> vector<16x1xf32>
    %27 = vector.broadcast %26 : vector<16x1xf32> to vector<16x128xf32>
    %28 = arith.mulf %23, %27 : vector<16x128xf32>
    %c0_18 = arith.constant 0 : index
    %c0_19 = arith.constant 0 : index
    %29 = vector.load %arg7[%c0_18, %c0_19] : memref<16x128xf32, #tpu.memory_space<vmem>>, vector<16x128xf32>
    tpu.vector_store %arg7[%c0_18, %c0_19], %16 {strides = array<i32>} : memref<16x128xf32, #tpu.memory_space<vmem>>, vector<16x128xf32>,
    %c0_20 = arith.constant 0 : index
    %c0_21 = arith.constant 0 : index
    %30 = vector.load %arg8[%c0_20, %c0_21] : memref<16x128xf32, #tpu.memory_space<vmem>>, vector<16x128xf32>
    tpu.vector_store %arg8[%c0_20, %c0_21], %28 {strides = array<i32>} : memref<16x128xf32, #tpu.memory_space<vmem>>, vector<16x128xf32>,
    return
  }
}

</mosaic_0001>

<llo_original>
// kernel: rnn_forward.1
$region0: #{rnn_forward.1}
  #allocation0 [shape = 'u32[]', space=smem, size = 0x4, offset = 0x4, fixed_abs, tag = 'smem constant byte address 0x4 - core index']
  #allocation1 [shape = 'u32[72,128]{1,0:T(1,128)}', space=vmem, size = 0x9000, scoped, tag = 'internal scratch']
  %s0 = inlined_call_operand.vmem [shape: f32[16,128], index: 0, kind: input, shape index: {}]
  %s1 = inlined_call_operand.vmem [shape: f32[16,128], index: 1, kind: input, shape index: {}]
  %s2 = inlined_call_operand.hbm [shape: f32[128,128], index: 2, kind: input, shape index: {}]
  %s3 = inlined_call_operand.hbm [shape: f32[128,128], index: 3, kind: input, shape index: {}]
  %s4 = inlined_call_operand.vmem [shape: f32[1,128], index: 4, kind: input, shape index: {}]
  %s5 = inlined_call_operand.hbm [shape: f32[128,128], index: 5, kind: input, shape index: {}]
  %s6 = inlined_call_operand.vmem [shape: f32[1,128], index: 6, kind: input, shape index: {}]
  %s7 = inlined_call_operand.hbm [shape: f32[16,128], index: 7, kind: output, shape index: {0}]
  %s8 = inlined_call_operand.hbm [shape: f32[16,128], index: 8, kind: output, shape index: {1}]
  %9 = xla_tuple %s7, %s8
  %s10 = sld [smem:[#allocation0]]
  $region58: #{rnn_forward.1} parent=0
    _
  %s12 = ssub.s32 1, %s10
  %s13 = scalar_select 0, %s12, %s10
  $region1: #{rnn_forward.1} parent=0
    #allocation2 [shape = 'u8[65536]{0}', space=vmem, size = 0x10000, scoped, tag = 'input window, operand 2, single buffered']
    #allocation3 [shape = 's32[1]{0}', space=sflag, size = 0x4, scoped, tag = 'scoped memory for rnn_forward.1']
    #allocation4 [shape = 's32[1]{0}', space=sflag, size = 0x4, scoped, tag = 'scoped memory for rnn_forward.1']
    #allocation5 [shape = 'u8[65536]{0}', space=vmem, size = 0x10000, scoped, tag = 'input window, operand 3, single buffered']
    #allocation6 [shape = 's32[1]{0}', space=sflag, size = 0x4, scoped, tag = 'scoped memory for rnn_forward.1']
    #allocation7 [shape = 'u8[65536]{0}', space=vmem, size = 0x10000, scoped, tag = 'input window, operand 5, single buffered']
    #allocation8 [shape = 'u8[8192]{0}', space=vmem, size = 0x2000, scoped, tag = 'output window, operand 0, single buffered']
    #allocation9 [shape = 'u8[8192]{0}', space=vmem, size = 0x2000, scoped, tag = 'output window, operand 1, single buffered']
    #allocation10 [shape = 's32[1]{0}', space=sflag, size = 0x4, scoped, tag = 'scoped memory for rnn_forward.1']
    %14 = vsyncpa [#allocation3], 0
    %15 = vsyncpa [#allocation6], 0
    %16 = vsyncpa [#allocation4], 0
    %17 = vsyncpa [#allocation10], 0
    // Predicated region
    $region2: #{rnn_forward.1} parent=1 // pred_check
      _
    $region3: #{rnn_forward.1} parent=1 // pred_check_branch
      %19 = sbr.rel (0) target = $region5
    $region4: #{rnn_forward.1} parent=1 // pred_region
      _
    $region5: #{rnn_forward.1} parent=1 // pred_fallthru
      _
    // Predicated region
    $region6: #{rnn_forward.1} parent=1 // pred_check
      _
    $region7: #{rnn_forward.1} parent=1 // pred_check_branch
      %21 = sbr.rel (0) target = $region9
    $region8: #{rnn_forward.1} parent=1 // pred_region
      _
    $region9: #{rnn_forward.1} parent=1 // pred_fallthru
      _
    // Predicated region
    $region10: #{rnn_forward.1} parent=1 // pred_check
      _
    $region11: #{rnn_forward.1} parent=1 // pred_check_branch
      %23 = sbr.rel (0) target = $region13
    $region12: #{rnn_forward.1} parent=1 // pred_region
      %25 = vsyncadd [#allocation3], 0
      %s26 = sshll.u32 %s2, 4
      %s27 = int_to_ptr.hbm [resolvable:$true] %s26
      %s28 = sshll.u32 [#allocation2], 4
      %s29 = int_to_ptr.vmem [resolvable:$true] %s28
      %34 = dma.hbm_to_vmem [thread:$0]  %s27, 2048, %s29, [#allocation3], 128, 128, 8
    $region13: #{rnn_forward.1} parent=1 // pred_fallthru
      _
    // Predicated region
    $region14: #{rnn_forward.1} parent=1 // pred_check
      _
    $region15: #{rnn_forward.1} parent=1 // pred_check_branch
      %36 = sbr.rel (0) target = $region17
    $region16: #{rnn_forward.1} parent=1 // pred_region
      %38 = vsyncadd [#allocation6], 0
      %s39 = sshll.u32 %s3, 4
      %s40 = int_to_ptr.hbm [resolvable:$true] %s39
      %s41 = sshll.u32 [#allocation5], 4
      %s42 = int_to_ptr.vmem [resolvable:$true] %s41
      %47 = dma.hbm_to_vmem [thread:$0]  %s40, 2048, %s42, [#allocation6], 128, 128, 8
    $region17: #{rnn_forward.1} parent=1 // pred_fallthru
      _
    // Predicated region
    $region18: #{rnn_forward.1} parent=1 // pred_check
      _
    $region19: #{rnn_forward.1} parent=1 // pred_check_branch
      %49 = sbr.rel (0) target = $region21
    $region20: #{rnn_forward.1} parent=1 // pred_region
      _
    $region21: #{rnn_forward.1} parent=1 // pred_fallthru
      _
    // Predicated region
    $region22: #{rnn_forward.1} parent=1 // pred_check
      _
    $region23: #{rnn_forward.1} parent=1 // pred_check_branch
      %51 = sbr.rel (0) target = $region25
    $region24: #{rnn_forward.1} parent=1 // pred_region
      %53 = vsyncadd [#allocation6], 0
      %s54 = sshll.u32 %s5, 4
      %s55 = int_to_ptr.hbm [resolvable:$true] %s54
      %s56 = sshll.u32 [#allocation7], 4
      %s57 = int_to_ptr.vmem [resolvable:$true] %s56
      %62 = dma.hbm_to_vmem [thread:$0]  %s55, 2048, %s57, [#allocation6], 128, 128, 8
    $region25: #{rnn_forward.1} parent=1 // pred_fallthru
      _
    // Predicated region
    $region26: #{rnn_forward.1} parent=1 // pred_check
      _
    $region27: #{rnn_forward.1} parent=1 // pred_check_branch
      %64 = sbr.rel (0) target = $region29
    $region28: #{rnn_forward.1} parent=1 // pred_region
      _
    $region29: #{rnn_forward.1} parent=1 // pred_fallthru
      _
    // Predicated region
    $region30: #{rnn_forward.1} parent=1 // pred_check
      _
    $region31: #{rnn_forward.1} parent=1 // pred_check_branch
      %66 = sbr.rel (0) target = $region33
    $region32: #{rnn_forward.1} parent=1 // pred_region
      %68 = dma.done [#allocation3], 2048
    $region33: #{rnn_forward.1} parent=1 // pred_fallthru
      _
    // Predicated region
    $region34: #{rnn_forward.1} parent=1 // pred_check
      _
    $region35: #{rnn_forward.1} parent=1 // pred_check_branch
      %70 = sbr.rel (0) target = $region37
    $region36: #{rnn_forward.1} parent=1 // pred_region
      %72 = dma.done [#allocation6], 2048
    $region37: #{rnn_forward.1} parent=1 // pred_fallthru
      _
    // Predicated region
    $region38: #{rnn_forward.1} parent=1 // pred_check
      _
    $region39: #{rnn_forward.1} parent=1 // pred_check_branch
      %74 = sbr.rel (0) target = $region41
    $region40: #{rnn_forward.1} parent=1 // pred_region
      %76 = dma.done [#allocation6], 2048
    $region41: #{rnn_forward.1} parent=1 // pred_fallthru
      _
    %v77 = vld [vmem:[%s4] sm:$0x1]
    %v79 = vperm.slane %v77, 0
    %v81 = vld [vmem:[%s6] sm:$0x1]
    %v83 = vperm.slane %v81, 0
    %v85 = vld [vmem:[%s0] sm:$0xff]
    %v86 = vld [vmem:[%s0 + $0x8] sm:$0xff]
    %v87 = vld [vmem:[%s1] sm:$0xff]
    %v88 = vld [vmem:[%s1 + $0x8] sm:$0xff]
    %v89 = vld [vmem:[#allocation2] sm:$0xff]
    %v90 = vld [vmem:[#allocation2 + $0x8] sm:$0xff]
    %v91 = vld [vmem:[#allocation2 + $0x10] sm:$0xff]
    %v92 = vld [vmem:[#allocation2 + $0x18] sm:$0xff]
    %v93 = vld [vmem:[#allocation2 + $0x20] sm:$0xff]
    %v94 = vld [vmem:[#allocation2 + $0x28] sm:$0xff]
    %v95 = vld [vmem:[#allocation2 + $0x30] sm:$0xff]
    %v96 = vld [vmem:[#allocation2 + $0x38] sm:$0xff]
    %v97 = vld [vmem:[#allocation2 + $0x40] sm:$0xff]
    %v98 = vld [vmem:[#allocation2 + $0x48] sm:$0xff]
    %v99 = vld [vmem:[#allocation2 + $0x50] sm:$0xff]
    %v100 = vld [vmem:[#allocation2 + $0x58] sm:$0xff]
    %v101 = vld [vmem:[#allocation2 + $0x60] sm:$0xff]
    %v102 = vld [vmem:[#allocation2 + $0x68] sm:$0xff]
    %v103 = vld [vmem:[#allocation2 + $0x70] sm:$0xff]
    %v104 = vld [vmem:[#allocation2 + $0x78] sm:$0xff]
    %v105 = vld [vmem:[#allocation5] sm:$0xff]
    %v106 = vld [vmem:[#allocation5 + $0x8] sm:$0xff]
    %v107 = vld [vmem:[#allocation5 + $0x10] sm:$0xff]
    %v108 = vld [vmem:[#allocation5 + $0x18] sm:$0xff]
    %v109 = vld [vmem:[#allocation5 + $0x20] sm:$0xff]
    %v110 = vld [vmem:[#allocation5 + $0x28] sm:$0xff]
    %v111 = vld [vmem:[#allocation5 + $0x30] sm:$0xff]
    %v112 = vld [vmem:[#allocation5 + $0x38] sm:$0xff]
    %v113 = vld [vmem:[#allocation5 + $0x40] sm:$0xff]
    %v114 = vld [vmem:[#allocation5 + $0x48] sm:$0xff]
    %v115 = vld [vmem:[#allocation5 + $0x50] sm:$0xff]
    %v116 = vld [vmem:[#allocation5 + $0x58] sm:$0xff]
    %v117 = vld [vmem:[#allocation5 + $0x60] sm:$0xff]
    %v118 = vld [vmem:[#allocation5 + $0x68] sm:$0xff]
    %v119 = vld [vmem:[#allocation5 + $0x70] sm:$0xff]
    %v120 = vld [vmem:[#allocation5 + $0x78] sm:$0xff]
    %v121 = vld [vmem:[#allocation7] sm:$0xff]
    %v122 = vld [vmem:[#allocation7 + $0x8] sm:$0xff]
    %v123 = vld [vmem:[#allocation7 + $0x10] sm:$0xff]
    %v124 = vld [vmem:[#allocation7 + $0x18] sm:$0xff]
    %v125 = vld [vmem:[#allocation7 + $0x20] sm:$0xff]
    %v126 = vld [vmem:[#allocation7 + $0x28] sm:$0xff]
    %v127 = vld [vmem:[#allocation7 + $0x30] sm:$0xff]
    %v128 = vld [vmem:[#allocation7 + $0x38] sm:$0xff]
    %v129 = vld [vmem:[#allocation7 + $0x40] sm:$0xff]
    %v130 = vld [vmem:[#allocation7 + $0x48] sm:$0xff]
    %v131 = vld [vmem:[#allocation7 + $0x50] sm:$0xff]
    %v132 = vld [vmem:[#allocation7 + $0x58] sm:$0xff]
    %v133 = vld [vmem:[#allocation7 + $0x60] sm:$0xff]
    %v134 = vld [vmem:[#allocation7 + $0x68] sm:$0xff]
    %v135 = vld [vmem:[#allocation7 + $0x70] sm:$0xff]
    %v136 = vld [vmem:[#allocation7 + $0x78] sm:$0xff]
    %137 = vmatpush.msra.mxu0 %v120
    %138 = vmatpush.msra.mxu0 %v119
    %139 = vmatpush.msra.mxu0 %v118
    %140 = vmatpush.msra.mxu0 %v117
    %141 = vmatpush.msra.mxu0 %v116
    %142 = vmatpush.msra.mxu0 %v115
    %143 = vmatpush.msra.mxu0 %v114
    %144 = vmatpush.msra.mxu0 %v113
    %145 = vmatpush.msra.mxu0 %v112
    %146 = vmatpush.msra.mxu0 %v111
    %147 = vmatpush.msra.mxu0 %v110
    %148 = vmatpush.msra.mxu0 %v109
    %149 = vmatpush.msra.mxu0 %v108
    %150 = vmatpush.msra.mxu0 %v107
    %151 = vmatpush.msra.mxu0 %v106
    %152 = vmatpush.msra.mxu0 %v105
    %153 = vmatmul.f32.gmra.mxu0 %v87
    %v154 = vpop.f32.mrf.mxu0
    %v155 = vadd.f32 0.0, %v154
    %156 = vmatmul.f32.gmra.mxu0 %v88
    %v157 = vpop.f32.mrf.mxu0
    %v158 = vadd.f32 0.0, %v157
    %159 = vdwg.mxu0
    %160 = vmatpush.msra.mxu0 %v104
    %161 = vmatpush.msra.mxu0 %v103
    %162 = vmatpush.msra.mxu0 %v102
    %163 = vmatpush.msra.mxu0 %v101
    %164 = vmatpush.msra.mxu0 %v100
    %165 = vmatpush.msra.mxu0 %v99
    %166 = vmatpush.msra.mxu0 %v98
    %167 = vmatpush.msra.mxu0 %v97
    %168 = vmatpush.msra.mxu0 %v96
    %169 = vmatpush.msra.mxu0 %v95
    %170 = vmatpush.msra.mxu0 %v94
    %171 = vmatpush.msra.mxu0 %v93
    %172 = vmatpush.msra.mxu0 %v92
    %173 = vmatpush.msra.mxu0 %v91
    %174 = vmatpush.msra.mxu0 %v90
    %175 = vmatpush.msra.mxu0 %v89
    %176 = vmatmul.f32.gmra.mxu0 %v85
    %v177 = vpop.f32.mrf.mxu0
    %v178 = vadd.f32 %v155, %v177
    %179 = vmatmul.f32.gmra.mxu0 %v86
    %v180 = vpop.f32.mrf.mxu0
    %v181 = vadd.f32 %v158, %v180
    %182 = vdwg.mxu0
    %v183 = vadd.f32 %v178, %v79
    %v184 = vadd.f32 %v181, %v79
    %v185 = vmax.f32 %v183, 0.0
    %v186 = vmax.f32 %v184, 0.0
    %187 = vmatpush.msra.mxu0 %v136
    %188 = vmatpush.msra.mxu0 %v135
    %189 = vmatpush.msra.mxu0 %v134
    %190 = vmatpush.msra.mxu0 %v133
    %191 = vmatpush.msra.mxu0 %v132
    %192 = vmatpush.msra.mxu0 %v131
    %193 = vmatpush.msra.mxu0 %v130
    %194 = vmatpush.msra.mxu0 %v129
    %195 = vmatpush.msra.mxu0 %v128
    %196 = vmatpush.msra.mxu0 %v127
    %197 = vmatpush.msra.mxu0 %v126
    %198 = vmatpush.msra.mxu0 %v125
    %199 = vmatpush.msra.mxu0 %v124
    %200 = vmatpush.msra.mxu0 %v123
    %201 = vmatpush.msra.mxu0 %v122
    %202 = vmatpush.msra.mxu0 %v121
    %203 = vmatmul.f32.gmra.mxu0 %v185
    %v204 = vpop.f32.mrf.mxu0
    %v205 = vadd.f32 %v83, %v204
    %206 = vmatmul.f32.gmra.mxu0 %v186
    %v207 = vpop.f32.mrf.mxu0
    %v208 = vadd.f32 %v83, %v207
    %209 = vdwg.mxu0
    %210 = vmax.xlane.f32.xlu0 %v205
    %v211 = vpop.xlane.xlu0 %210
    %212 = vmax.xlane.f32.xlu0 %v208
    %v213 = vpop.xlane.xlu0 %212
    %v214 = vsub.f32 %v205, %v211
    %v215 = vsub.f32 %v208, %v213
    %v216 = vmul.f32 %v214, 1.442695
    %v217 = vpow.pop %v216
    %v218 = vmul.f32 %v215, 1.442695
    %v219 = vpow.pop %v218
    %220 = vadd.xlane.f32.xlu0 %v217
    %v221 = vpop.xlane.xlu0 %220
    %222 = vadd.xlane.f32.xlu0 %v219
    %v223 = vpop.xlane.xlu0 %222
    %v224 = vrcp.pop %v221
    %v225 = vrcp.pop %v223
    %v226 = vmul.f32 %v217, %v224
    %v227 = vmul.f32 %v219, %v225
    %228 = vst [vmem:[#allocation8] sm:$0xff] %v185
    %229 = vst [vmem:[#allocation8 + $0x8] sm:$0xff] %v186
    %230 = vst [vmem:[#allocation9] sm:$0xff] %v226
    %231 = vst [vmem:[#allocation9 + $0x8] sm:$0xff] %v227
    // Predicated region
    $region42: #{rnn_forward.1} parent=1 // pred_check
      _
    $region43: #{rnn_forward.1} parent=1 // pred_check_branch
      %233 = sbr.rel (0) target = $region45
    $region44: #{rnn_forward.1} parent=1 // pred_region
      %235 = vsyncadd [#allocation4], 0
      %s236 = sshll.u32 [#allocation8], 4
      %s237 = int_to_ptr.vmem [resolvable:$true] %s236
      %s238 = sshll.u32 %s7, 4
      %s239 = int_to_ptr.hbm [resolvable:$true] %s238
      %244 = dma.vmem_to_hbm [thread:$0]  %s237, 256, %s239, [#allocation4], 128, 128, 8
    $region45: #{rnn_forward.1} parent=1 // pred_fallthru
      _
    // Predicated region
    $region46: #{rnn_forward.1} parent=1 // pred_check
      _
    $region47: #{rnn_forward.1} parent=1 // pred_check_branch
      %246 = sbr.rel (0) target = $region49
    $region48: #{rnn_forward.1} parent=1 // pred_region
      %248 = vsyncadd [#allocation10], 0
      %s249 = sshll.u32 [#allocation9], 4
      %s250 = int_to_ptr.vmem [resolvable:$true] %s249
      %s251 = sshll.u32 %s8, 4
      %s252 = int_to_ptr.hbm [resolvable:$true] %s251
      %257 = dma.vmem_to_hbm [thread:$0]  %s250, 256, %s252, [#allocation10], 128, 128, 8
    $region49: #{rnn_forward.1} parent=1 // pred_fallthru
      _
    // Predicated region
    $region50: #{rnn_forward.1} parent=1 // pred_check
      _
    $region51: #{rnn_forward.1} parent=1 // pred_check_branch
      %259 = sbr.rel (0) target = $region53
    $region52: #{rnn_forward.1} parent=1 // pred_region
      %261 = dma.done [#allocation4], 256
    $region53: #{rnn_forward.1} parent=1 // pred_fallthru
      _
    // Predicated region
    $region54: #{rnn_forward.1} parent=1 // pred_check
      _
    $region55: #{rnn_forward.1} parent=1 // pred_check_branch
      %263 = sbr.rel (0) target = $region57
    $region56: #{rnn_forward.1} parent=1 // pred_region
      %265 = dma.done [#allocation10], 256
    $region57: #{rnn_forward.1} parent=1 // pred_fallthru
      _
    %266 = vsyncpa [#allocation3], 1
    %267 = vsyncpa [#allocation6], 1
    %268 = vsyncpa [#allocation4], 1
    %269 = vsyncpa [#allocation10], 1

</llo_original>
